<compile_context>
chip_gen: v7x
topology: tpu7x:2x2x1
jax: 0.10.0
libtpu: 0.0.40
codegen_flags: <defaults>
</compile_context>

<pallas_src>
import functools

import jax
import jax.numpy as jnp
from jax.experimental import pallas as pl
from jax.experimental.pallas import tpu as pltpu


def _round_up(n, m):
    return ((n + m - 1) // m) * m


def mlp_kernel(x_ref, w1_ref, b1_ref, w2_ref, b2_ref, o_ref):
    # fc1: (TB, Din) @ (Din, H) on the MXU, f32 accumulation.
    h = jnp.dot(x_ref[...], w1_ref[...], preferred_element_type=jnp.float32)
    # Bias + ReLU in f32 on the VPU.
    h = jnp.maximum(h + b1_ref[...], 0.0)
    # fc2: (TB, H) @ (H, Dout); feed the MXU bf16 again, accumulate f32.
    h = h.astype(w2_ref.dtype)
    logits = jnp.dot(h, w2_ref[...], preferred_element_type=jnp.float32)
    logits = logits + b2_ref[...]
    # sigmoid(x) = 1 / (1 + exp(-x)); exp and approx reciprocal both hit the EUP.
    denom = 1.0 + jnp.exp(-logits)
    o_ref[...] = pl.reciprocal(denom, approx=True).astype(o_ref.dtype)


@functools.partial(jax.jit, static_argnames=("block_b", "use_bf16"))
def mlp_forward(x, w1, b1, w2, b2, *, block_b=256, use_bf16=True):
    """x: (B, Din); w1: (Din, H); b1: (1, H); w2: (H, Dout); b2: (1, Dout)."""
    B, d_in = x.shape
    d_h = w1.shape[1]
    d_out = w2.shape[1]

    # Lane-dense padded dims: every last dim a multiple of 128.
    d_in_p = _round_up(d_in, 128)
    d_h_p = _round_up(d_h, 128)
    d_out_p = _round_up(d_out, 128)

    # Batch tile: MXU-row-sized for real batches, sublane-aligned for tiny ones.
    tb = min(_round_up(block_b, 8), _round_up(B, 8))
    b_p = _round_up(B, tb)

    mm_dtype = jnp.bfloat16 if use_bf16 else jnp.float32

    def pad2(a, rows, cols, dtype):
        a = a.astype(dtype)
        return jnp.pad(a, ((0, rows - a.shape[0]), (0, cols - a.shape[1])))

    x_p = pad2(x, b_p, d_in_p, mm_dtype)
    w1_p = pad2(w1, d_in_p, d_h_p, mm_dtype)
    w2_p = pad2(w2, d_h_p, d_out_p, mm_dtype)
    b1_p = pad2(b1.reshape(1, -1), 1, d_h_p, jnp.float32)
    b2_p = pad2(b2.reshape(1, -1), 1, d_out_p, jnp.float32)

    # VMEM budget: double-buffered x/out tiles, (double-buffered) resident
    # weights/biases, plus the f32 hidden intermediate.  Cap under v7x's 64 MiB.
    mm_bytes = 2 if use_bf16 else 4
    vmem_needed = (
        2 * (tb * d_in_p * mm_bytes + tb * d_out_p * 4)
        + 2 * ((d_in_p * d_h_p + d_h_p * d_out_p) * mm_bytes
               + (d_h_p + d_out_p) * 4)
        + tb * d_h_p * 4)
    vmem_limit = int(min(max(2 * vmem_needed, 16 * 1024 * 1024),
                         48 * 1024 * 1024))

    grid = (b_p // tb,)
    out_p = pl.pallas_call(
        mlp_kernel,
        out_shape=jax.ShapeDtypeStruct((b_p, d_out_p), jnp.float32),
        grid=grid,
        in_specs=[
            pl.BlockSpec((tb, d_in_p), lambda i: (i, 0)),        # x: batch-tiled
            pl.BlockSpec((d_in_p, d_h_p), lambda i: (0, 0)),     # w1: resident
            pl.BlockSpec((1, d_h_p), lambda i: (0, 0)),          # b1: resident
            pl.BlockSpec((d_h_p, d_out_p), lambda i: (0, 0)),    # w2: resident
            pl.BlockSpec((1, d_out_p), lambda i: (0, 0)),        # b2: resident
        ],
        out_specs=pl.BlockSpec((tb, d_out_p), lambda i: (i, 0)),
        compiler_params=pltpu.CompilerParams(
            dimension_semantics=("parallel",),
            vmem_limit_bytes=vmem_limit,
        ),
    )(x_p, w1_p, b1_p, w2_p, b2_p)

    # Slice padded batch rows / output lanes back off.
    return out_p[:B, :d_out]


def init_params(key, input_size, hidden_size, output_size):
    """Deterministic init mimicking torch.nn.Linear default U[-1/sqrt(fan_in), +...]."""
    k1, k2, k3, k4 = jax.random.split(key, 4)
    bound1 = 1.0 / jnp.sqrt(input_size)
    bound2 = 1.0 / jnp.sqrt(hidden_size)
    # Stored as (in, out) so the kernel does x @ W.
    w1 = jax.random.uniform(k1, (input_size, hidden_size), jnp.float32,
                            minval=-bound1, maxval=bound1)
    b1 = jax.random.uniform(k2, (1, hidden_size), jnp.float32,
                            minval=-bound1, maxval=bound1)
    w2 = jax.random.uniform(k3, (hidden_size, output_size), jnp.float32,
                            minval=-bound2, maxval=bound2)
    b2 = jax.random.uniform(k4, (1, output_size), jnp.float32,
                            minval=-bound2, maxval=bound2)
    return w1, b1, w2, b2


if __name__ == "__main__":
    # Small shapes consistent with the module (pure MLP over flat vectors);
    # deliberately non-multiples of 8/128 with several batch tiles so the
    # padding + grid paths are exercised.
    batch = 160
    input_size = 48
    hidden_size = 96
    output_size = 10

    key = jax.random.PRNGKey(0)
    kx, kp = jax.random.split(key)
    x = jax.random.normal(kx, (batch, input_size), jnp.float32)
    w1, b1, w2, b2 = init_params(kp, input_size, hidden_size, output_size)

    out = mlp_forward(x, w1, b1, w2, b2, block_b=64)
    out = jax.block_until_ready(out)

    # Pure-JAX reference with the same bf16 quantization of the matmul inputs
    # (so only f32-accumulation order and the approx reciprocal differ).
    def bf(a):
        return a.astype(jnp.bfloat16).astype(jnp.float32)

    h_ref = jnp.maximum(bf(x) @ bf(w1) + b1, 0.0)
    ref = jax.nn.sigmoid(bf(h_ref) @ bf(w2) + b2)

    assert out.shape == (batch, output_size)
    max_err = float(jnp.max(jnp.abs(out - ref)))
    assert jnp.allclose(out, ref, atol=1e-2, rtol=1e-2), f"max abs err {max_err}"

    print("KERNEL_OK")
</pallas_src>

<mosaic_0001>
module attributes {stable_mosaic.version = 11 : i64} {
  func.func @mlp_kernel(%arg0: i32, %arg1: memref<64x128xbf16, #tpu.memory_space<vmem>>, %arg2: memref<128x128xbf16, #tpu.memory_space<vmem>>, %arg3: memref<1x128xf32, #tpu.memory_space<vmem>>, %arg4: memref<128x128xbf16, #tpu.memory_space<vmem>>, %arg5: memref<1x128xf32, #tpu.memory_space<vmem>>, %arg6: memref<64x128xf32, #tpu.memory_space<vmem>>) attributes {dimension_semantics = [#tpu.dimension_semantics<parallel>], iteration_bounds = array<i64: 3>, scalar_prefetch = 0 : i64, scratch_operands = 0 : i64, tpu.core_type = #tpu.core_type<tc>, window_params = [{transform_indices = @transform_0, window_bounds = array<i64: 64, 128>}, {pipeline_mode = #tpu.pipeline_mode<synchronous>, transform_indices = @transform_1, window_bounds = array<i64: 128, 128>}, {pipeline_mode = #tpu.pipeline_mode<synchronous>, transform_indices = @transform_2, window_bounds = array<i64: 1, 128>}, {pipeline_mode = #tpu.pipeline_mode<synchronous>, transform_indices = @transform_3, window_bounds = array<i64: 128, 128>}, {pipeline_mode = #tpu.pipeline_mode<synchronous>, transform_indices = @transform_4, window_bounds = array<i64: 1, 128>}, {transform_indices = @transform_5, window_bounds = array<i64: 64, 128>}]} {
    %c0 = arith.constant 0 : index
    %c0_0 = arith.constant 0 : index
    %0 = vector.load %arg1[%c0, %c0_0] : memref<64x128xbf16, #tpu.memory_space<vmem>>, vector<64x128xbf16>
    %c0_1 = arith.constant 0 : index
    %c0_2 = arith.constant 0 : index
    %1 = vector.load %arg2[%c0_1, %c0_2] : memref<128x128xbf16, #tpu.memory_space<vmem>>, vector<128x128xbf16>
    %cst = arith.constant dense<0.000000e+00> : vector<64x128xf32>
    %2 = tpu.matmul %0, %1, %cst {dimension_numbers = #tpu.dot_dimension_numbers<[1], [0], [0], [1], [0, 0, 1, 1], [], []>} : vector<64x128xbf16>, vector<128x128xbf16>, vector<64x128xf32> -> vector<64x128xf32>
    %c0_3 = arith.constant 0 : index
    %c0_4 = arith.constant 0 : index
    %3 = vector.load %arg3[%c0_3, %c0_4] : memref<1x128xf32, #tpu.memory_space<vmem>>, vector<1x128xf32>
    %4 = vector.broadcast %3 : vector<1x128xf32> to vector<64x128xf32>
    %5 = arith.addf %2, %4 : vector<64x128xf32>
    %cst_5 = arith.constant 0.000000e+00 : f32
    %6 = vector.broadcast %cst_5 : f32 to vector<64x128xf32>
    %7 = arith.maximumf %5, %6 : vector<64x128xf32>
    %8 = arith.truncf %7 : vector<64x128xf32> to vector<64x128xbf16>
    %c0_6 = arith.constant 0 : index
    %c0_7 = arith.constant 0 : index
    %9 = vector.load %arg4[%c0_6, %c0_7] : memref<128x128xbf16, #tpu.memory_space<vmem>>, vector<128x128xbf16>
    %cst_8 = arith.constant dense<0.000000e+00> : vector<64x128xf32>
    %10 = tpu.matmul %8, %9, %cst_8 {dimension_numbers = #tpu.dot_dimension_numbers<[1], [0], [0], [1], [0, 0, 1, 1], [], []>} : vector<64x128xbf16>, vector<128x128xbf16>, vector<64x128xf32> -> vector<64x128xf32>
    %c0_9 = arith.constant 0 : index
    %c0_10 = arith.constant 0 : index
    %11 = vector.load %arg5[%c0_9, %c0_10] : memref<1x128xf32, #tpu.memory_space<vmem>>, vector<1x128xf32>
    %12 = vector.broadcast %11 : vector<1x128xf32> to vector<64x128xf32>
    %13 = arith.addf %10, %12 : vector<64x128xf32>
    %cst_11 = arith.constant 0.000000e+00 : f32
    %14 = vector.broadcast %cst_11 : f32 to vector<64x128xf32>
    %15 = arith.subf %14, %13 : vector<64x128xf32>
    %16 = math.exp %15 : vector<64x128xf32>
    %cst_12 = arith.constant 1.000000e+00 : f32
    %17 = vector.broadcast %cst_12 : f32 to vector<64x128xf32>
    %18 = arith.addf %17, %16 : vector<64x128xf32>
    %19 = tpu.reciprocal %18 {approx = true} : vector<64x128xf32> -> vector<64x128xf32>
    %c0_13 = arith.constant 0 : index
    %c0_14 = arith.constant 0 : index
    %20 = vector.load %arg6[%c0_13, %c0_14] : memref<64x128xf32, #tpu.memory_space<vmem>>, vector<64x128xf32>
    tpu.vector_store %arg6[%c0_13, %c0_14], %19 {strides = array<i32>} : memref<64x128xf32, #tpu.memory_space<vmem>>, vector<64x128xf32>,
    return
  }
  func.func @transform_0(%arg0: i32) -> (i32, i32) {
    %c0_i32 = arith.constant 0 : i32
    %c0_i32_0 = arith.constant 0 : i32
    return %arg0, %c0_i32 : i32, i32
  }
  func.func @transform_1(%arg0: i32) -> (i32, i32) {
    %c0_i32 = arith.constant 0 : i32
    %c0_i32_0 = arith.constant 0 : i32
    %c0_i32_1 = arith.constant 0 : i32
    return %c0_i32, %c0_i32_0 : i32, i32
  }
  func.func @transform_2(%arg0: i32) -> (i32, i32) {
    %c0_i32 = arith.constant 0 : i32
    %c0_i32_0 = arith.constant 0 : i32
    %c0_i32_1 = arith.constant 0 : i32
    return %c0_i32, %c0_i32_0 : i32, i32
  }
  func.func @transform_3(%arg0: i32) -> (i32, i32) {
    %c0_i32 = arith.constant 0 : i32
    %c0_i32_0 = arith.constant 0 : i32
    %c0_i32_1 = arith.constant 0 : i32
    return %c0_i32, %c0_i32_0 : i32, i32
  }
  func.func @transform_4(%arg0: i32) -> (i32, i32) {
    %c0_i32 = arith.constant 0 : i32
    %c0_i32_0 = arith.constant 0 : i32
    %c0_i32_1 = arith.constant 0 : i32
    return %c0_i32, %c0_i32_0 : i32, i32
  }
  func.func @transform_5(%arg0: i32) -> (i32, i32) {
    %c0_i32 = arith.constant 0 : i32
    %c0_i32_0 = arith.constant 0 : i32
    return %arg0, %c0_i32 : i32, i32
  }
}

</mosaic_0001>

<llo_original>
// kernel: mlp_forward.1
$region0: #{mlp_forward.1}
  #allocation0 [shape = 'u32[]', space=smem, size = 0x4, offset = 0x4, fixed_abs, tag = 'smem constant byte address 0x4 - core index']
  #allocation1 [shape = 'u32[144,128]{1,0:T(1,128)}', space=vmem, size = 0x12000, scoped, tag = 'internal scratch']
  %s0 = inlined_call_operand.vmem [shape: bf16[192,128], index: 0, kind: input, shape index: {}]
  %s1 = inlined_call_operand.vmem [shape: bf16[128,128], index: 1, kind: input, shape index: {}]
  %s2 = inlined_call_operand.vmem [shape: f32[1,128], index: 2, kind: input, shape index: {}]
  %s3 = inlined_call_operand.vmem [shape: bf16[128,128], index: 3, kind: input, shape index: {}]
  %s4 = inlined_call_operand.vmem [shape: f32[1,128], index: 4, kind: input, shape index: {}]
  %s5 = inlined_call_operand.vmem [shape: f32[192,128], index: 5, kind: output, shape index: {}]
  %s6 = sld [smem:[#allocation0]]
  $region53: #{mlp_forward.1} parent=0
    _
  %s8 = ssub.s32 1, %s6
  %s9 = scalar_select 0, %s8, %s6
  loop: start=0, step=1, limit=5
  $region2: #{mlp_forward.1} parent=0 // loop_pre_header
    _
  $region3: #{mlp_forward.1} parent=0 // loop_header
    %s11 = sphi 0, %s15
    %p12 = scmp.ge.s32.totalorder %s11, 5
    %s21 = sphi 0, %s23
    %s24 = sphi 0, %s21
    %s25 = sphi 0, %s24
    %s41 = sphi 0, %s25
    %s45 = sphi 0, %s45
    %s47 = sphi 0, %s45
    %s48 = sphi 0, %s47
    %s62 = sphi 0, %s48
    %s66 = sphi 0, %s66
    %s68 = sphi 0, %s66
    %s69 = sphi 0, %s68
    %s83 = sphi 0, %s69
    %s87 = sphi 0, %s87
    %s89 = sphi 0, %s87
    %s90 = sphi 0, %s89
    %s104 = sphi 0, %s90
    %s108 = sphi 0, %s108
    %s110 = sphi 0, %s108
    %s111 = sphi 0, %s110
    %s125 = sphi 0, %s111
    %s131 = sphi 0, %s133
    %s134 = sphi 0, %s131
    %s135 = sphi 0, %s134
    %s151 = sphi 0, %s135
  $region4: #{mlp_forward.1} parent=0 // loop_header_branch
    %14 = sbr.rel (%p12) target = $region8
  $region5: #{mlp_forward.1} parent=0 // loop_body
    %s16 = ssub.s32 %s11, 1
    %s17 = ssub.s32 %s11, 2
    %s18 = sadd.s32 %s11, 1
    %s19 = ssub.s32 %s11, %s18
    %p20 = scmp.eq.s32.totalorder %s19, 0
    %s22 = sadd.s32 %s21, 1
    %s23 = scalar_select %p20, %s21, %s22
    %p26 = pneg %p20
    %p27 = scmp.eq.s32.totalorder %s11, 2
    %p28 = por %p26, %p27
    %p29 = scmp.ne.s32.totalorder %s21, %s24
    %p30 = scmp.eq.s32.totalorder %s11, 0
    %p31 = por %p29, %p30
    %p32 = scmp.ne.s32.totalorder %s21, %s24
    %p33 = scmp.eq.s32.totalorder %s16, 2
    %p34 = por %p32, %p33
    %p35 = scmp.ne.s32.totalorder %s24, %s25
    %p36 = scmp.eq.s32.totalorder %s16, 0
    %p37 = por %p35, %p36
    %p38 = scmp.ne.s32.totalorder %s24, %s25
    %p39 = scmp.eq.s32.totalorder %s17, 2
    %p40 = por %p38, %p39
    %p42 = scmp.ne.s32.totalorder %s25, %s41
    %p43 = scmp.eq.s32.totalorder %s17, 0
    %p44 = por %p42, %p43
    %s46 = sadd.s32 %s45, 1
    %p49 = scmp.eq.s32.totalorder %s11, 2
    %p50 = scmp.ne.s32.totalorder %s45, %s47
    %p51 = scmp.eq.s32.totalorder %s11, 0
    %p52 = por %p50, %p51
    %p53 = scmp.ne.s32.totalorder %s45, %s47
    %p54 = scmp.eq.s32.totalorder %s16, 2
    %p55 = por %p53, %p54
    %p56 = scmp.ne.s32.totalorder %s47, %s48
    %p57 = scmp.eq.s32.totalorder %s16, 0
    %p58 = por %p56, %p57
    %p59 = scmp.ne.s32.totalorder %s47, %s48
    %p60 = scmp.eq.s32.totalorder %s17, 2
    %p61 = por %p59, %p60
    %p63 = scmp.ne.s32.totalorder %s48, %s62
    %p64 = scmp.eq.s32.totalorder %s17, 0
    %p65 = por %p63, %p64
    %s67 = sadd.s32 %s66, 1
    %p70 = scmp.eq.s32.totalorder %s11, 2
    %p71 = scmp.ne.s32.totalorder %s66, %s68
    %p72 = scmp.eq.s32.totalorder %s11, 0
    %p73 = por %p71, %p72
    %p74 = scmp.ne.s32.totalorder %s66, %s68
    %p75 = scmp.eq.s32.totalorder %s16, 2
    %p76 = por %p74, %p75
    %p77 = scmp.ne.s32.totalorder %s68, %s69
    %p78 = scmp.eq.s32.totalorder %s16, 0
    %p79 = por %p77, %p78
    %p80 = scmp.ne.s32.totalorder %s68, %s69
    %p81 = scmp.eq.s32.totalorder %s17, 2
    %p82 = por %p80, %p81
    %p84 = scmp.ne.s32.totalorder %s69, %s83
    %p85 = scmp.eq.s32.totalorder %s17, 0
    %p86 = por %p84, %p85
    %s88 = sadd.s32 %s87, 1
    %p91 = scmp.eq.s32.totalorder %s11, 2
    %p92 = scmp.ne.s32.totalorder %s87, %s89
    %p93 = scmp.eq.s32.totalorder %s11, 0
    %p94 = por %p92, %p93
    %p95 = scmp.ne.s32.totalorder %s87, %s89
    %p96 = scmp.eq.s32.totalorder %s16, 2
    %p97 = por %p95, %p96
    %p98 = scmp.ne.s32.totalorder %s89, %s90
    %p99 = scmp.eq.s32.totalorder %s16, 0
    %p100 = por %p98, %p99
    %p101 = scmp.ne.s32.totalorder %s89, %s90
    %p102 = scmp.eq.s32.totalorder %s17, 2
    %p103 = por %p101, %p102
    %p105 = scmp.ne.s32.totalorder %s90, %s104
    %p106 = scmp.eq.s32.totalorder %s17, 0
    %p107 = por %p105, %p106
    %s109 = sadd.s32 %s108, 1
    %p112 = scmp.eq.s32.totalorder %s11, 2
    %p113 = scmp.ne.s32.totalorder %s108, %s110
    %p114 = scmp.eq.s32.totalorder %s11, 0
    %p115 = por %p113, %p114
    %p116 = scmp.ne.s32.totalorder %s108, %s110
    %p117 = scmp.eq.s32.totalorder %s16, 2
    %p118 = por %p116, %p117
    %p119 = scmp.ne.s32.totalorder %s110, %s111
    %p120 = scmp.eq.s32.totalorder %s16, 0
    %p121 = por %p119, %p120
    %p122 = scmp.ne.s32.totalorder %s110, %s111
    %p123 = scmp.eq.s32.totalorder %s17, 2
    %p124 = por %p122, %p123
    %p126 = scmp.ne.s32.totalorder %s111, %s125
    %p127 = scmp.eq.s32.totalorder %s17, 0
    %p128 = por %p126, %p127
    %s129 = ssub.s32 %s11, %s18
    %p130 = scmp.eq.s32.totalorder %s129, 0
    %s132 = sadd.s32 %s131, 1
    %s133 = scalar_select %p130, %s131, %s132
    %p136 = pneg %p130
    %p137 = scmp.eq.s32.totalorder %s11, 2
    %p138 = por %p136, %p137
    %p139 = scmp.ne.s32.totalorder %s131, %s134
    %p140 = scmp.eq.s32.totalorder %s11, 0
    %p141 = por %p139, %p140
    %p142 = scmp.ne.s32.totalorder %s131, %s134
    %p143 = scmp.eq.s32.totalorder %s16, 2
    %p144 = por %p142, %p143
    %p145 = scmp.ne.s32.totalorder %s134, %s135
    %p146 = scmp.eq.s32.totalorder %s16, 0
    %p147 = por %p145, %p146
    %p148 = scmp.ne.s32.totalorder %s134, %s135
    %p149 = scmp.eq.s32.totalorder %s17, 2
    %p150 = por %p148, %p149
    %p152 = scmp.ne.s32.totalorder %s135, %s151
    %p153 = scmp.eq.s32.totalorder %s17, 0
    %p154 = por %p152, %p153
    %p155 = scmp.le.s32.totalorder 1, %s11
    %p156 = scmp.lt.s32.totalorder %s11, 4
    %p157 = pnand %p155, %p156
    %p158 = pneg %p157
    // Predicated region
    $region9: #{mlp_forward.1} parent=5 // pred_check
      _
    $region10: #{mlp_forward.1} parent=5 // pred_check_branch
      %160 = sbr.rel (%p157) target = $region12
    $region11: #{mlp_forward.1} parent=5 // pred_region
      %s161 = ssub.s32 %s11, 1
      // Predicated region
      $region13: #{mlp_forward.1} parent=11 // pred_check
        %p162 = pneg %p58
      $region14: #{mlp_forward.1} parent=11 // pred_check_branch
        %164 = sbr.rel (%p162) target = $region16
      $region15: #{mlp_forward.1} parent=11 // pred_region
        _
      $region16: #{mlp_forward.1} parent=11 // pred_fallthru
        _
      // Predicated region
      $region17: #{mlp_forward.1} parent=11 // pred_check
        %p165 = pneg %p79
      $region18: #{mlp_forward.1} parent=11 // pred_check_branch
        %167 = sbr.rel (%p165) target = $region20
      $region19: #{mlp_forward.1} parent=11 // pred_region
        _
      $region20: #{mlp_forward.1} parent=11 // pred_fallthru
        _
      // Predicated region
      $region21: #{mlp_forward.1} parent=11 // pred_check
        %p168 = pneg %p100
      $region22: #{mlp_forward.1} parent=11 // pred_check_branch
        %170 = sbr.rel (%p168) target = $region24
      $region23: #{mlp_forward.1} parent=11 // pred_region
        _
      $region24: #{mlp_forward.1} parent=11 // pred_fallthru
        _
      // Predicated region
      $region25: #{mlp_forward.1} parent=11 // pred_check
        %p171 = pneg %p121
      $region26: #{mlp_forward.1} parent=11 // pred_check_branch
        %173 = sbr.rel (%p171) target = $region28
      $region27: #{mlp_forward.1} parent=11 // pred_region
        _
      $region28: #{mlp_forward.1} parent=11 // pred_fallthru
        _
    $region12: #{mlp_forward.1} parent=5 // pred_fallthru
      _
    %p174 = scmp.lt.s32.totalorder %s11, 3
    // Predicated region
    $region29: #{mlp_forward.1} parent=5 // pred_check
      %p175 = pneg %p174
    $region30: #{mlp_forward.1} parent=5 // pred_check_branch
      %177 = sbr.rel (%p175) target = $region32
    $region31: #{mlp_forward.1} parent=5 // pred_region
      // Predicated region
      $region33: #{mlp_forward.1} parent=31 // pred_check
        %p178 = pneg %p31
      $region34: #{mlp_forward.1} parent=31 // pred_check_branch
        %180 = sbr.rel (%p178) target = $region36
      $region35: #{mlp_forward.1} parent=31 // pred_region
        %s181 = smul.u32 8, %s11
        %p182 = scmp.lt.s32.totalorder %s181, 23
        %s183 = scalar_select %p182, %s181, 23
        %s184 = smul.addr %s183, 4
        %s185 = scalar_lea.vmem %s0, %s184
        %s186 = smul.u32 8, %s11
      $region36: #{mlp_forward.1} parent=31 // pred_fallthru
        _
    $region32: #{mlp_forward.1} parent=5 // pred_fallthru
      _
    %p187 = scmp.le.s32.totalorder 1, %s11
    %p188 = scmp.lt.s32.totalorder %s11, 4
    %p189 = pnand %p187, %p188
    %p190 = pneg %p189
    // Predicated region
    $region37: #{mlp_forward.1} parent=5 // pred_check
      _
    $region38: #{mlp_forward.1} parent=5 // pred_check_branch
      %192 = sbr.rel (%p189) target = $region40
    $region39: #{mlp_forward.1} parent=5 // pred_region
      %s193 = ssub.s32 %s11, 1
      %s194 = smul.u32 8, %s16
      %p195 = scmp.lt.s32.totalorder %s194, 23
      %s196 = scalar_select %p195, %s194, 23
      %s197 = smul.addr %s196, 4
      %s198 = scalar_lea.vmem %s0, %s197
      %p199 = pneg %p37
      %p200 = pneg %p34
      %p201 = pneg %p58
      %p202 = pneg %p55
      %p203 = pneg %p79
      %p204 = pneg %p76
      %p205 = pneg %p100
      %p206 = pneg %p97
      %p207 = pneg %p121
      %p208 = pneg %p118
      %p209 = pneg %p147
      %p210 = pneg %p144
      %s211 = smul.u32 8, %s16
      %p212 = scmp.lt.s32.totalorder %s211, 23
      %s213 = scalar_select %p212, %s211, 23
      %s214 = smul.addr %s213, 8
      %s215 = scalar_lea.vmem %s5, %s214
      %s216 = smul.u32 8, %s16
      %p217 = scmp.lt.s32.totalorder %s216, 23
      %s218 = scalar_select %p217, %s216, 23
      %s219 = smul.addr %s218, 4
      %s220 = scalar_lea.vmem %s0, %s219
      %s221 = smul.u32 8, %s16
      %s222 = smul.u32 8, %s16
      %p223 = scmp.lt.s32.totalorder %s222, 23
      %s224 = scalar_select %p223, %s222, 23
      %s225 = smul.addr %s224, 8
      %s226 = scalar_lea.vmem %s5, %s225
      %s227 = smul.u32 8, %s16
      %v229 = vld [vmem:[%s220] sm:$0xf]
      %v230 = vld [vmem:[%s220 + $0x4] sm:$0xf]
      %v231 = vld [vmem:[%s220 + $0x8] sm:$0xf]
      %v232 = vld [vmem:[%s220 + $0xc] sm:$0xf]
      %v233 = vld [vmem:[%s220 + $0x10] sm:$0xf]
      %v234 = vld [vmem:[%s220 + $0x14] sm:$0xf]
      %v235 = vld [vmem:[%s220 + $0x18] sm:$0xf]
      %v236 = vld [vmem:[%s220 + $0x1c] sm:$0xf]
      %v237 = vld [vmem:[%s1] sm:$0xf]
      %v238 = vld [vmem:[%s1 + $0x4] sm:$0xf]
      %v239 = vld [vmem:[%s1 + $0x8] sm:$0xf]
      %v240 = vld [vmem:[%s1 + $0xc] sm:$0xf]
      %v241 = vld [vmem:[%s1 + $0x10] sm:$0xf]
      %v242 = vld [vmem:[%s1 + $0x14] sm:$0xf]
      %v243 = vld [vmem:[%s1 + $0x18] sm:$0xf]
      %v244 = vld [vmem:[%s1 + $0x1c] sm:$0xf]
      %v245 = vld [vmem:[%s1 + $0x20] sm:$0xf]
      %v246 = vld [vmem:[%s1 + $0x24] sm:$0xf]
      %v247 = vld [vmem:[%s1 + $0x28] sm:$0xf]
      %v248 = vld [vmem:[%s1 + $0x2c] sm:$0xf]
      %v249 = vld [vmem:[%s1 + $0x30] sm:$0xf]
      %v250 = vld [vmem:[%s1 + $0x34] sm:$0xf]
      %v251 = vld [vmem:[%s1 + $0x38] sm:$0xf]
      %v252 = vld [vmem:[%s1 + $0x3c] sm:$0xf]
      %v253 = vld [vmem:[%s2] sm:$0x1]
      %v255 = vlaneseq
      %v256 = vshrl.u32 %v255, 7
      %v257 = vsub.s32 0, %v256
      %v258 = vrot.slane %v253, %v257
      %v268 = vunpack.c.l.b16 %v229
      %v269 = vunpack.c.l.b16 %v230
      %v270 = vunpack.c.l.b16 %v231
      %v271 = vunpack.c.l.b16 %v232
      %v272 = vunpack.c.l.b16 %v233
      %v273 = vunpack.c.l.b16 %v234
      %v274 = vunpack.c.l.b16 %v235
      %v275 = vunpack.c.l.b16 %v236
      %v276 = vpack.c.b16 %v269, %v268
      %v277 = vpack.c.b16 %v271, %v270
      %v278 = vpack.c.b16 %v273, %v272
      %v279 = vpack.c.b16 %v275, %v274
      %v300 = vunpack.c.l.b16 %v237
      %v301 = vunpack.c.l.b16 %v238
      %v302 = vunpack.c.l.b16 %v239
      %v303 = vunpack.c.l.b16 %v240
      %v304 = vunpack.c.l.b16 %v241
      %v305 = vunpack.c.l.b16 %v242
      %v306 = vunpack.c.l.b16 %v243
      %v307 = vunpack.c.l.b16 %v244
      %v308 = vunpack.c.l.b16 %v245
      %v309 = vunpack.c.l.b16 %v246
      %v310 = vunpack.c.l.b16 %v247
      %v311 = vunpack.c.l.b16 %v248
      %v312 = vunpack.c.l.b16 %v249
      %v313 = vunpack.c.l.b16 %v250
      %v314 = vunpack.c.l.b16 %v251
      %v315 = vunpack.c.l.b16 %v252
      %v316 = vpack.c.b16 %v301, %v300
      %v317 = vpack.c.b16 %v303, %v302
      %v318 = vpack.c.b16 %v305, %v304
      %v319 = vpack.c.b16 %v307, %v306
      %v320 = vpack.c.b16 %v309, %v308
      %v321 = vpack.c.b16 %v311, %v310
      %v322 = vpack.c.b16 %v313, %v312
      %v323 = vpack.c.b16 %v315, %v314
      %332 = vmatprep.subr.bf16.mxu0 0
      %333 = vmatpush1.bf16.msra.mxu0 %v316
      %334 = vmatprep.subr.bf16.mxu0 0
      %335 = vmatpush1.bf16.msra.mxu0 %v317
      %336 = vmatprep.subr.bf16.mxu0 0
      %337 = vmatpush1.bf16.msra.mxu0 %v318
      %338 = vmatprep.subr.bf16.mxu0 0
      %339 = vmatpush1.bf16.msra.mxu0 %v319
      %340 = vmatprep.subr.bf16.mxu0 0
      %341 = vmatpush1.bf16.msra.mxu0 %v320
      %342 = vmatprep.subr.bf16.mxu0 0
      %343 = vmatpush1.bf16.msra.mxu0 %v321
      %344 = vmatprep.subr.bf16.mxu0 0
      %345 = vmatpush1.bf16.msra.mxu0 %v322
      %346 = vmatprep.subr.bf16.mxu0 0
      %347 = vmatpush1.bf16.msra.mxu0 %v323
      %348 = vmatprep.subr.bf16.mxu0 0
      %349 = vmatpush1.bf16.msra.mxu0 0
      %350 = vmatprep.subr.bf16.mxu0 0
      %351 = vmatpush1.bf16.msra.mxu0 0
      %352 = vmatprep.subr.bf16.mxu0 0
      %353 = vmatpush1.bf16.msra.mxu0 0
      %354 = vmatprep.subr.bf16.mxu0 0
      %355 = vmatpush1.bf16.msra.mxu0 0
      %356 = vmatprep.subr.bf16.mxu0 0
      %357 = vmatpush1.bf16.msra.mxu0 0
      %358 = vmatprep.subr.bf16.mxu0 0
      %359 = vmatpush1.bf16.msra.mxu0 0
      %360 = vmatprep.subr.bf16.mxu0 0
      %361 = vmatpush1.bf16.msra.mxu0 0
      %362 = vmatprep.subr.bf16.mxu0 0
      %363 = vmatpush1.bf16.msra.mxu0 0
      %364 = vmatprep.mubr.bf16.mxu0 0
      %365 = vmatmul.mubr.bf16.gmra.mrb[0].mxu0 %v276
      %v366 = vpop.f32.mrb[0].mxu0
      %v367 = vadd.f32 %v258, %v366
      %v368 = vpop.f32.mrb[0].mxu0
      %v369 = vpop.f32.mrb[0].mxu0
      %v370 = vadd.f32 %v258, %v369
      %v371 = vpop.f32.mrb[0].mxu0
      %372 = vmatprep.mubr.bf16.mxu0 0
      %373 = vmatmul.mubr.bf16.gmra.mrb[0].mxu0 %v277
      %v374 = vpop.f32.mrb[0].mxu0
      %v375 = vadd.f32 %v258, %v374
      %v376 = vpop.f32.mrb[0].mxu0
      %v377 = vpop.f32.mrb[0].mxu0
      %v378 = vadd.f32 %v258, %v377
      %v379 = vpop.f32.mrb[0].mxu0
      %380 = vmatprep.mubr.bf16.mxu0 0
      %381 = vmatmul.mubr.bf16.gmra.mrb[0].mxu0 %v278
      %v382 = vpop.f32.mrb[0].mxu0
      %v383 = vadd.f32 %v258, %v382
      %v384 = vpop.f32.mrb[0].mxu0
      %v385 = vpop.f32.mrb[0].mxu0
      %v386 = vadd.f32 %v258, %v385
      %v387 = vpop.f32.mrb[0].mxu0
      %388 = vmatprep.mubr.bf16.mxu0 0
      %389 = vmatmul.mubr.bf16.gmra.mrb[0].mxu0 %v279
      %v390 = vpop.f32.mrb[0].mxu0
      %v391 = vadd.f32 %v258, %v390
      %v392 = vpop.f32.mrb[0].mxu0
      %v393 = vpop.f32.mrb[0].mxu0
      %v394 = vadd.f32 %v258, %v393
      %v395 = vpop.f32.mrb[0].mxu0
      %396 = vdwg.mxu0
      %v397 = vmax.f32 %v367, 0.0
      %v398 = vmax.f32 %v370, 0.0
      %v399 = vmax.f32 %v375, 0.0
      %v400 = vmax.f32 %v378, 0.0
      %v401 = vmax.f32 %v383, 0.0
      %v402 = vmax.f32 %v386, 0.0
      %v403 = vmax.f32 %v391, 0.0
      %v404 = vmax.f32 %v394, 0.0
      %v405 = vpack.c.bf16 %v398, %v397
      %v406 = vpack.c.bf16 %v400, %v399
      %v407 = vpack.c.bf16 %v402, %v401
      %v408 = vpack.c.bf16 %v404, %v403
      %v409 = vld [vmem:[%s3] sm:$0xf]
      %v410 = vld [vmem:[%s3 + $0x4] sm:$0xf]
      %v411 = vld [vmem:[%s3 + $0x8] sm:$0xf]
      %v412 = vld [vmem:[%s3 + $0xc] sm:$0xf]
      %v413 = vld [vmem:[%s3 + $0x10] sm:$0xf]
      %v414 = vld [vmem:[%s3 + $0x14] sm:$0xf]
      %v415 = vld [vmem:[%s3 + $0x18] sm:$0xf]
      %v416 = vld [vmem:[%s3 + $0x1c] sm:$0xf]
      %v417 = vld [vmem:[%s3 + $0x20] sm:$0xf]
      %v418 = vld [vmem:[%s3 + $0x24] sm:$0xf]
      %v419 = vld [vmem:[%s3 + $0x28] sm:$0xf]
      %v420 = vld [vmem:[%s3 + $0x2c] sm:$0xf]
      %v421 = vld [vmem:[%s3 + $0x30] sm:$0xf]
      %v422 = vld [vmem:[%s3 + $0x34] sm:$0xf]
      %v423 = vld [vmem:[%s3 + $0x38] sm:$0xf]
      %v424 = vld [vmem:[%s3 + $0x3c] sm:$0xf]
      %v425 = vld [vmem:[%s4] sm:$0x1]
      %v427 = vlaneseq
      %v428 = vshrl.u32 %v427, 7
      %v429 = vsub.s32 0, %v428
      %v430 = vrot.slane %v425, %v429
      %v448 = vunpack.c.l.b16 %v409
      %v449 = vunpack.c.l.b16 %v410
      %v450 = vunpack.c.l.b16 %v411
      %v451 = vunpack.c.l.b16 %v412
      %v452 = vunpack.c.l.b16 %v413
      %v453 = vunpack.c.l.b16 %v414
      %v454 = vunpack.c.l.b16 %v415
      %v455 = vunpack.c.l.b16 %v416
      %v456 = vunpack.c.l.b16 %v417
      %v457 = vunpack.c.l.b16 %v418
      %v458 = vunpack.c.l.b16 %v419
      %v459 = vunpack.c.l.b16 %v420
      %v460 = vunpack.c.l.b16 %v421
      %v461 = vunpack.c.l.b16 %v422
      %v462 = vunpack.c.l.b16 %v423
      %v463 = vunpack.c.l.b16 %v424
      %v464 = vpack.c.b16 %v449, %v448
      %v465 = vpack.c.b16 %v451, %v450
      %v466 = vpack.c.b16 %v453, %v452
      %v467 = vpack.c.b16 %v455, %v454
      %v468 = vpack.c.b16 %v457, %v456
      %v469 = vpack.c.b16 %v459, %v458
      %v470 = vpack.c.b16 %v461, %v460
      %v471 = vpack.c.b16 %v463, %v462
      %480 = vmatprep.subr.bf16.mxu0 0
      %481 = vmatpush1.bf16.msra.mxu0 %v464
      %482 = vmatprep.subr.bf16.mxu0 0
      %483 = vmatpush1.bf16.msra.mxu0 %v465
      %484 = vmatprep.subr.bf16.mxu0 0
      %485 = vmatpush1.bf16.msra.mxu0 %v466
      %486 = vmatprep.subr.bf16.mxu0 0
      %487 = vmatpush1.bf16.msra.mxu0 %v467
      %488 = vmatprep.subr.bf16.mxu0 0
      %489 = vmatpush1.bf16.msra.mxu0 %v468
      %490 = vmatprep.subr.bf16.mxu0 0
      %491 = vmatpush1.bf16.msra.mxu0 %v469
      %492 = vmatprep.subr.bf16.mxu0 0
      %493 = vmatpush1.bf16.msra.mxu0 %v470
      %494 = vmatprep.subr.bf16.mxu0 0
      %495 = vmatpush1.bf16.msra.mxu0 %v471
      %496 = vmatprep.subr.bf16.mxu0 0
      %497 = vmatpush1.bf16.msra.mxu0 0
      %498 = vmatprep.subr.bf16.mxu0 0
      %499 = vmatpush1.bf16.msra.mxu0 0
      %500 = vmatprep.subr.bf16.mxu0 0
      %501 = vmatpush1.bf16.msra.mxu0 0
      %502 = vmatprep.subr.bf16.mxu0 0
      %503 = vmatpush1.bf16.msra.mxu0 0
      %504 = vmatprep.subr.bf16.mxu0 0
      %505 = vmatpush1.bf16.msra.mxu0 0
      %506 = vmatprep.subr.bf16.mxu0 0
      %507 = vmatpush1.bf16.msra.mxu0 0
      %508 = vmatprep.subr.bf16.mxu0 0
      %509 = vmatpush1.bf16.msra.mxu0 0
      %510 = vmatprep.subr.bf16.mxu0 0
      %511 = vmatpush1.bf16.msra.mxu0 0
      %512 = vmatprep.mubr.bf16.mxu0 0
      %513 = vmatmul.mubr.bf16.gmra.mrb[0].mxu0 %v405
      %v514 = vpop.f32.mrb[0].mxu0
      %v515 = vadd.f32 %v430, %v514
      %v516 = vpop.f32.mrb[0].mxu0
      %v517 = vpop.f32.mrb[0].mxu0
      %v518 = vadd.f32 %v430, %v517
      %v519 = vpop.f32.mrb[0].mxu0
      %520 = vmatprep.mubr.bf16.mxu0 0
      %521 = vmatmul.mubr.bf16.gmra.mrb[0].mxu0 %v406
      %v522 = vpop.f32.mrb[0].mxu0
      %v523 = vadd.f32 %v430, %v522
      %v524 = vpop.f32.mrb[0].mxu0
      %v525 = vpop.f32.mrb[0].mxu0
      %v526 = vadd.f32 %v430, %v525
      %v527 = vpop.f32.mrb[0].mxu0
      %528 = vmatprep.mubr.bf16.mxu0 0
      %529 = vmatmul.mubr.bf16.gmra.mrb[0].mxu0 %v407
      %v530 = vpop.f32.mrb[0].mxu0
      %v531 = vadd.f32 %v430, %v530
      %v532 = vpop.f32.mrb[0].mxu0
      %v533 = vpop.f32.mrb[0].mxu0
      %v534 = vadd.f32 %v430, %v533
      %v535 = vpop.f32.mrb[0].mxu0
      %536 = vmatprep.mubr.bf16.mxu0 0
      %537 = vmatmul.mubr.bf16.gmra.mrb[0].mxu0 %v408
      %v538 = vpop.f32.mrb[0].mxu0
      %v539 = vadd.f32 %v430, %v538
      %v540 = vpop.f32.mrb[0].mxu0
      %v541 = vpop.f32.mrb[0].mxu0
      %v542 = vadd.f32 %v430, %v541
      %v543 = vpop.f32.mrb[0].mxu0
      %544 = vdwg.mxu0
      %v545 = vsub.f32 0.0, %v515
      %v546 = vsub.f32 0.0, %v518
      %v547 = vsub.f32 0.0, %v523
      %v548 = vsub.f32 0.0, %v526
      %v549 = vsub.f32 0.0, %v531
      %v550 = vsub.f32 0.0, %v534
      %v551 = vsub.f32 0.0, %v539
      %v552 = vsub.f32 0.0, %v542
      %v553 = vmul.f32 %v545, 1.442695
      %v554 = vpow.pop %v553
      %v555 = vmul.f32 %v546, 1.442695
      %v556 = vpow.pop %v555
      %v557 = vmul.f32 %v547, 1.442695
      %v558 = vpow.pop %v557
      %v559 = vmul.f32 %v548, 1.442695
      %v560 = vpow.pop %v559
      %v561 = vmul.f32 %v549, 1.442695
      %v562 = vpow.pop %v561
      %v563 = vmul.f32 %v550, 1.442695
      %v564 = vpow.pop %v563
      %v565 = vmul.f32 %v551, 1.442695
      %v566 = vpow.pop %v565
      %v567 = vmul.f32 %v552, 1.442695
      %v568 = vpow.pop %v567
      %v569 = vadd.f32 %v554, 1.0
      %v570 = vadd.f32 %v556, 1.0
      %v571 = vadd.f32 %v558, 1.0
      %v572 = vadd.f32 %v560, 1.0
      %v573 = vadd.f32 %v562, 1.0
      %v574 = vadd.f32 %v564, 1.0
      %v575 = vadd.f32 %v566, 1.0
      %v576 = vadd.f32 %v568, 1.0
      %v577 = vrcp.pop %v569
      %v578 = vrcp.pop %v570
      %v579 = vrcp.pop %v571
      %v580 = vrcp.pop %v572
      %v581 = vrcp.pop %v573
      %v582 = vrcp.pop %v574
      %v583 = vrcp.pop %v575
      %v584 = vrcp.pop %v576
      %585 = vst [vmem:[%s226] sm:$0xff] %v577
      %586 = vst [vmem:[%s226 + $0x8] sm:$0xff] %v578
      %587 = vst [vmem:[%s226 + $0x10] sm:$0xff] %v579
      %588 = vst [vmem:[%s226 + $0x18] sm:$0xff] %v580
      %589 = vst [vmem:[%s226 + $0x20] sm:$0xff] %v581
      %590 = vst [vmem:[%s226 + $0x28] sm:$0xff] %v582
      %591 = vst [vmem:[%s226 + $0x30] sm:$0xff] %v583
      %592 = vst [vmem:[%s226 + $0x38] sm:$0xff] %v584
      %s593 = smul.u32 8, %s16
      %p594 = scmp.lt.s32.totalorder %s593, 23
      %s595 = scalar_select %p594, %s593, 23
      %s596 = smul.addr %s595, 8
      %s597 = scalar_lea.vmem %s5, %s596
      // Predicated region
      $region41: #{mlp_forward.1} parent=39 // pred_check
        %p598 = pneg %p144
      $region42: #{mlp_forward.1} parent=39 // pred_check_branch
        %600 = sbr.rel (%p598) target = $region44
      $region43: #{mlp_forward.1} parent=39 // pred_region
        %s601 = smul.u32 8, %s16
      $region44: #{mlp_forward.1} parent=39 // pred_fallthru
        _
    $region40: #{mlp_forward.1} parent=5 // pred_fallthru
      _
    %p602 = scmp.le.s32.totalorder 2, %s11
    // Predicated region
    $region45: #{mlp_forward.1} parent=5 // pred_check
      %p603 = pneg %p602
    $region46: #{mlp_forward.1} parent=5 // pred_check_branch
      %605 = sbr.rel (%p603) target = $region48
    $region47: #{mlp_forward.1} parent=5 // pred_region
      %s606 = ssub.s32 %s11, 2
      // Predicated region
      $region49: #{mlp_forward.1} parent=47 // pred_check
        %p607 = pneg %p150
      $region50: #{mlp_forward.1} parent=47 // pred_check_branch
        %609 = sbr.rel (%p607) target = $region52
      $region51: #{mlp_forward.1} parent=47 // pred_region
        %s610 = smul.u32 8, %s17
        %p611 = scmp.lt.s32.totalorder %s610, 23
        %s612 = scalar_select %p611, %s610, 23
        %s613 = smul.addr %s612, 8
        %s614 = scalar_lea.vmem %s5, %s613
      $region52: #{mlp_forward.1} parent=47 // pred_fallthru
        _
    $region48: #{mlp_forward.1} parent=5 // pred_fallthru
      _
  $region6: #{mlp_forward.1} parent=0 // loop_footer
    %s15 = sadd.s32 1, %s11
  $region7: #{mlp_forward.1} parent=0 // loop_footer_branch
    %10 = sbr.rel target = $region3
  $region8: #{mlp_forward.1} parent=0 // loop_exit
    _

</llo_original>
